<compile_context>
chip_gen: v7x
topology: tpu7x:2x2x1
jax: 0.10.0
libtpu: 0.0.40
codegen_flags: <defaults>
</compile_context>

<pallas_src>
import functools

import jax
import jax.numpy as jnp
from jax.experimental import pallas as pl
from jax.experimental.pallas import tpu as pltpu


_LANES = 128
_SUBLANES = 8


def _round_up(x, m):
    return ((x + m - 1) // m) * m


def _scoped_vmem_limit_bytes():
    """Scoped-VMEM budget that is safe on v5e/v6e (128 MiB) and v7x (64 MiB)."""
    cap = 64 * 1024 * 1024
    try:
        info = pltpu.get_tpu_info()
        cap = int(getattr(info, "vmem_capacity_bytes", cap) or cap)
    except Exception:
        pass
    return int(min(cap // 2, 64 * 1024 * 1024))


def _pick_tile_n(n_rows, n_classes, pred_itemsize, vmem_limit_bytes):
    """Largest row tile whose blocks + in-kernel temporaries fit scoped VMEM."""
    f32_row = n_classes * 4
    # Per-row VMEM while a tile is in flight:
    #   2x double-buffered pred block rows
    # + ~4 live (row, C) f32 temporaries (f32 upcast, exp, one-hot select,
    #   broadcasts)
    # + 2x lane-padded int32 target rows: a (TN, 1) int32 block pads to
    #   128 lanes in VMEM, i.e. ~512 B/row, not 4 B/row.
    bytes_per_row = 2 * n_classes * pred_itemsize + 4 * f32_row + 2 * _LANES * 4
    fixed = n_classes * _LANES * 4            # ones matrix for the MXU exp-sum
    budget = max(vmem_limit_bytes // 2 - fixed, bytes_per_row)
    tile = budget // bytes_per_row
    # ~4 MiB of pred per block already sits near the HBM roofline; bigger
    # blocks buy little and cost pipelining latency.
    tile = min(tile, max(_SUBLANES,
                         (4 * 1024 * 1024) // max(n_classes * pred_itemsize, 1)))
    # Keep >= 4 grid steps when N allows it so v7x's two TensorCores both get
    # work from the "parallel" grid axis.
    tile = min(tile, max(_SUBLANES, _round_up(pl.cdiv(n_rows, 4), _SUBLANES)))
    tile = min(tile, _round_up(n_rows, _SUBLANES))
    tile = max(_SUBLANES, (tile // _SUBLANES) * _SUBLANES)
    return int(tile)


def _tile_loss_sum(x, tgt, valid, *, confidence, smooth_val, n_classes):
    """Sum over this tile's rows of the per-row label-smoothing CE loss.

    x:     (TN, C) float32 logits (already zeroed on padded rows iff valid is
           not None).
    tgt:   (TN, 1) int32 class indices.
    valid: (TN, 1) bool row-validity mask, or None if every row is valid.
    Returns a (1, 1) float32 tile partial sum.
    """
    tn = x.shape[0]
    # Per-row max: the only remaining per-row cross-lane (XLU) reduction.
    m = jnp.max(x, axis=-1, keepdims=True)                       # (TN, 1)
    e = jnp.exp(x - m)                                           # (TN, C)  EUP
    # Per-row sum of exp on the otherwise-idle MXU instead of an XLU tree
    # reduce: one vmatmul push per (8,128) vreg.  HIGHEST keeps f32 accuracy.
    ones = jnp.ones((n_classes, _LANES), dtype=jnp.float32)
    s = jnp.dot(e, ones,
                preferred_element_type=jnp.float32,
                precision=jax.lax.Precision.HIGHEST)[:, 0:1]     # (TN, 1)
    lse = jnp.log(s) + m                                         # (TN, 1)
    if valid is not None:
        lse = jnp.where(valid, lse, 0.0)                         # cheap (TN,1)

    # Deferred (tile-level) sums: reduce over rows/sublanes first (cheap VPU
    # vreg adds), then a single lane reduction per (1, C) vector.
    col = jax.lax.broadcasted_iota(jnp.int32, (1, n_classes), 1)  # (1, C)
    onehot_x = jnp.where(col == tgt, x, 0.0)                      # (TN, C)
    col_sum_x = jnp.sum(x, axis=0, keepdims=True)                 # (1, C)
    col_sum_tx = jnp.sum(onehot_x, axis=0, keepdims=True)         # (1, C)
    sum_x = jnp.sum(col_sum_x, axis=-1, keepdims=True)            # (1, 1)
    sum_tx = jnp.sum(col_sum_tx, axis=-1, keepdims=True)          # (1, 1)
    sum_lse = jnp.sum(lse, axis=0, keepdims=True)                 # (1, 1)

    #   sum_r sum_c -true_dist[r,c] * logp[r,c]
    # = smooth_val*(C*Σlse − Σx) + (confidence − smooth_val)*(Σlse − Σ x[tgt])
    return (smooth_val * (n_classes * sum_lse - sum_x)
            + (confidence - smooth_val) * (sum_lse - sum_tx))


def _ls_loss_kernel(pred_ref, tgt_ref, out_ref, *,
                    confidence, smooth_val, n_rows, n_classes, tile_n,
                    num_tiles):
    x = pred_ref[...].astype(jnp.float32)     # (TN, C); f32 math in-kernel
    tgt = tgt_ref[...]                        # (TN, 1) int32

    def emit(x_in, valid):
        tile_sum = _tile_loss_sum(
            x_in, tgt, valid,
            confidence=confidence, smooth_val=smooth_val, n_classes=n_classes)
        # Lane-dense unmasked store of this tile's partial (replicated 8x128).
        out_ref[...] = jnp.broadcast_to(tile_sum, out_ref.shape)

    if n_rows % tile_n == 0:
        # No padded rows anywhere: masking is skipped at compile time.
        emit(x, None)
    else:
        i = pl.program_id(0)
        last = num_tiles - 1

        @pl.when(i != last)
        def _():
            # Interior tiles: no masking work at all.
            emit(x, None)

        @pl.when(i == last)
        def _():
            # Only the padded last tile pays for the full-width sanitization.
            row = jax.lax.broadcasted_iota(jnp.int32, (tile_n, 1), 0)
            valid = (last * tile_n + row) < n_rows                # (TN, 1)
            emit(jnp.where(valid, x, 0.0), valid)


def label_smoothing_loss(pred, target, *, classes, smoothing=0.0, tile_n=None):
    """pred: (N, C) float32/bfloat16, target: (N,) int -> scalar float32 loss."""
    N, C = pred.shape
    assert C == classes
    confidence = 1.0 - smoothing
    smooth_val = smoothing / (classes - 1) if classes > 1 else 0.0

    vmem_limit = _scoped_vmem_limit_bytes()
    if tile_n is None:
        tile_n = _pick_tile_n(N, C, jnp.dtype(pred.dtype).itemsize, vmem_limit)
    num_tiles = pl.cdiv(N, tile_n)

    tgt2d = target.astype(jnp.int32).reshape(N, 1)

    kernel = functools.partial(
        _ls_loss_kernel,
        confidence=confidence,
        smooth_val=smooth_val,
        n_rows=N,
        n_classes=C,
        tile_n=tile_n,
        num_tiles=num_tiles,
    )

    partials = pl.pallas_call(
        kernel,
        out_shape=jax.ShapeDtypeStruct((num_tiles, _SUBLANES, _LANES),
                                       jnp.float32),
        grid_spec=pltpu.PrefetchScalarGridSpec(
            num_scalar_prefetch=0,
            grid=(num_tiles,),
            in_specs=[
                pl.BlockSpec((tile_n, C), lambda i: (i, 0)),
                pl.BlockSpec((tile_n, 1), lambda i: (i, 0)),
            ],
            out_specs=pl.BlockSpec((1, _SUBLANES, _LANES), lambda i: (i, 0, 0)),
        ),
        compiler_params=pltpu.CompilerParams(
            dimension_semantics=("parallel",),   # megacore-sharded on v7x
            vmem_limit_bytes=vmem_limit,
        ),
    )(pred, tgt2d)

    # Each tile's partial is replicated over its (8, 128) block; take one copy.
    return jnp.sum(partials[:, 0, 0]) / jnp.float32(N)


def _reference(pred, target, classes, smoothing):
    logp = jax.nn.log_softmax(pred.astype(jnp.float32), axis=-1)
    confidence = 1.0 - smoothing
    smooth_val = smoothing / (classes - 1)
    true_dist = jnp.full_like(logp, smooth_val)
    true_dist = true_dist.at[jnp.arange(pred.shape[0]), target].set(confidence)
    return jnp.mean(jnp.sum(-true_dist * logp, axis=-1))


if __name__ == "__main__":
    key = jax.random.PRNGKey(0)
    smoothing = 0.1
    C = 128

    # Primary small case: batch of 16 predictions over 128 classes
    # (auto tile picks 8 rows -> 2 grid steps, both unmasked).
    N = 16
    k1, k2 = jax.random.split(key)
    pred = jax.random.normal(k1, (N, C), dtype=jnp.float32)
    target = jax.random.randint(k2, (N,), 0, C, dtype=jnp.int32)

    loss = jax.block_until_ready(
        label_smoothing_loss(pred, target, classes=C, smoothing=smoothing))
    ref = _reference(pred, target, C, smoothing)
    assert jnp.allclose(loss, ref, rtol=1e-4, atol=1e-4), (loss, ref)

    # Ragged batch (exercises the pl.when-gated padded last tile).
    N2 = 13
    k3, k4 = jax.random.split(k1)
    pred2 = jax.random.normal(k3, (N2, C), dtype=jnp.float32)
    target2 = jax.random.randint(k4, (N2,), 0, C, dtype=jnp.int32)
    loss2 = jax.block_until_ready(
        label_smoothing_loss(pred2, target2, classes=C, smoothing=smoothing))
    ref2 = _reference(pred2, target2, C, smoothing)
    assert jnp.allclose(loss2, ref2, rtol=1e-4, atol=1e-4), (loss2, ref2)

    # Multi-tile grid with a forced tile size + padded last tile.
    N3 = 40
    k5, k6 = jax.random.split(k2)
    pred3 = jax.random.normal(k5, (N3, C), dtype=jnp.float32)
    target3 = jax.random.randint(k6, (N3,), 0, C, dtype=jnp.int32)
    loss3 = jax.block_until_ready(
        label_smoothing_loss(pred3, target3, classes=C, smoothing=smoothing,
                             tile_n=16))
    ref3 = _reference(pred3, target3, C, smoothing)
    assert jnp.allclose(loss3, ref3, rtol=1e-4, atol=1e-4), (loss3, ref3)

    # bf16 input path (halves HBM traffic; math stays f32 in-kernel).
    pred_bf16 = pred.astype(jnp.bfloat16)
    loss4 = jax.block_until_ready(
        label_smoothing_loss(pred_bf16, target, classes=C, smoothing=smoothing))
    ref4 = _reference(pred_bf16, target, C, smoothing)
    assert jnp.allclose(loss4, ref4, rtol=2e-3, atol=2e-3), (loss4, ref4)

    print("KERNEL_OK")
</pallas_src>

<mosaic_0001>
module attributes {stable_mosaic.version = 11 : i64} {
  func.func @_ls_loss_kernel(%arg0: i32, %arg1: memref<8x128xf32, #tpu.memory_space<vmem>>, %arg2: memref<8x1xi32, #tpu.memory_space<vmem>>, %arg3: memref<1x8x128xf32, #tpu.memory_space<vmem>>) attributes {dimension_semantics = [#tpu.dimension_semantics<parallel>], iteration_bounds = array<i64: 2>, scalar_prefetch = 0 : i64, scratch_operands = 0 : i64, tpu.core_type = #tpu.core_type<tc>, window_params = [{transform_indices = @transform_0, window_bounds = array<i64: 8, 128>}, {transform_indices = @transform_1, window_bounds = array<i64: 8, 1>}, {transform_indices = @transform_2, window_bounds = array<i64: 1, 8, 128>}]} {
    %c0 = arith.constant 0 : index
    %c0_0 = arith.constant 0 : index
    %0 = vector.load %arg1[%c0, %c0_0] : memref<8x128xf32, #tpu.memory_space<vmem>>, vector<8x128xf32>
    %c0_1 = arith.constant 0 : index
    %c0_2 = arith.constant 0 : index
    %1 = vector.load %arg2[%c0_1, %c0_2] : memref<8x1xi32, #tpu.memory_space<vmem>>, vector<8x1xi32>
    %cst = arith.constant dense<0xFF800000> : vector<8xf32>
    %2 = vector.multi_reduction <maximumf>, %0, %cst [1] : vector<8x128xf32> to vector<8xf32>
    %3 = vector.shape_cast %2 : vector<8xf32> to vector<8x1xf32>
    %4 = vector.broadcast %3 : vector<8x1xf32> to vector<8x128xf32>
    %5 = arith.subf %0, %4 : vector<8x128xf32>
    %6 = math.exp %5 : vector<8x128xf32>
    %cst_3 = arith.constant 1.000000e+00 : f32
    %7 = vector.broadcast %cst_3 : f32 to vector<128x128xf32>
    %cst_4 = arith.constant dense<0.000000e+00> : vector<8x128xf32>
    %8 = tpu.matmul %6, %7, %cst_4 {dimension_numbers = #tpu.dot_dimension_numbers<[1], [0], [0], [1], [0, 0, 1, 1], [], []>, precision = #tpu.contract_precision<fp32>} : vector<8x128xf32>, vector<128x128xf32>, vector<8x128xf32> -> vector<8x128xf32>
    %9 = vector.extract_strided_slice %8 {offsets = [0, 0], sizes = [8, 1], strides = [1, 1]} : vector<8x128xf32> to vector<8x1xf32>
    %10 = math.log %9 : vector<8x1xf32>
    %11 = arith.addf %10, %3 : vector<8x1xf32>
    %12 = tpu.iota {dimensions = array<i32: 1>} : vector<1x128xi32>
    %13 = vector.broadcast %12 : vector<1x128xi32> to vector<8x128xi32>
    %14 = vector.broadcast %1 : vector<8x1xi32> to vector<8x128xi32>
    %15 = arith.cmpi eq, %13, %14 : vector<8x128xi32>
    %cst_5 = arith.constant 0.000000e+00 : f32
    %16 = vector.broadcast %cst_5 : f32 to vector<8x128xf32>
    %17 = arith.select %15, %0, %16 : vector<8x128xi1>, vector<8x128xf32>
    %cst_6 = arith.constant dense<0.000000e+00> : vector<128xf32>
    %18 = vector.multi_reduction <add>, %0, %cst_6 [0] : vector<8x128xf32> to vector<128xf32>
    %19 = vector.shape_cast %18 : vector<128xf32> to vector<1x128xf32>
    %cst_7 = arith.constant dense<0.000000e+00> : vector<128xf32>
    %20 = vector.multi_reduction <add>, %17, %cst_7 [0] : vector<8x128xf32> to vector<128xf32>
    %21 = vector.shape_cast %20 : vector<128xf32> to vector<1x128xf32>
    %cst_8 = arith.constant dense<0.000000e+00> : vector<1xf32>
    %22 = vector.multi_reduction <add>, %19, %cst_8 [1] : vector<1x128xf32> to vector<1xf32>
    %23 = vector.shape_cast %22 : vector<1xf32> to vector<1x1xf32>
    %cst_9 = arith.constant dense<0.000000e+00> : vector<1xf32>
    %24 = vector.multi_reduction <add>, %21, %cst_9 [1] : vector<1x128xf32> to vector<1xf32>
    %25 = vector.shape_cast %24 : vector<1xf32> to vector<1x1xf32>
    %cst_10 = arith.constant dense<0.000000e+00> : vector<1xf32>
    %26 = vector.multi_reduction <add>, %11, %cst_10 [0] : vector<8x1xf32> to vector<1xf32>
    %27 = vector.shape_cast %26 : vector<1xf32> to vector<1x1xf32>
    %cst_11 = arith.constant 1.280000e+02 : f32
    %28 = vector.broadcast %cst_11 : f32 to vector<1x1xf32>
    %29 = arith.mulf %28, %27 : vector<1x1xf32>
    %30 = arith.subf %29, %23 : vector<1x1xf32>
    %cst_12 = arith.constant 7.87401571E-4 : f32
    %31 = vector.broadcast %cst_12 : f32 to vector<1x1xf32>
    %32 = arith.mulf %31, %30 : vector<1x1xf32>
    %33 = arith.subf %27, %25 : vector<1x1xf32>
    %cst_13 = arith.constant 0.899212599 : f32
    %34 = vector.broadcast %cst_13 : f32 to vector<1x1xf32>
    %35 = arith.mulf %34, %33 : vector<1x1xf32>
    %36 = arith.addf %32, %35 : vector<1x1xf32>
    %37 = vector.shape_cast %36 : vector<1x1xf32> to vector<1x1x1xf32>
    %38 = vector.broadcast %37 : vector<1x1x1xf32> to vector<1x8x128xf32>
    %c0_14 = arith.constant 0 : index
    %c0_15 = arith.constant 0 : index
    %c0_16 = arith.constant 0 : index
    %39 = vector.load %arg3[%c0_14, %c0_15, %c0_16] : memref<1x8x128xf32, #tpu.memory_space<vmem>>, vector<1x8x128xf32>
    tpu.vector_store %arg3[%c0_14, %c0_15, %c0_16], %38 {strides = array<i32>} : memref<1x8x128xf32, #tpu.memory_space<vmem>>, vector<1x8x128xf32>,
    return
  }
  func.func @transform_0(%arg0: i32) -> (i32, i32) {
    %c0_i32 = arith.constant 0 : i32
    %c0_i32_0 = arith.constant 0 : i32
    return %arg0, %c0_i32 : i32, i32
  }
  func.func @transform_1(%arg0: i32) -> (i32, i32) {
    %c0_i32 = arith.constant 0 : i32
    %c0_i32_0 = arith.constant 0 : i32
    return %arg0, %c0_i32 : i32, i32
  }
  func.func @transform_2(%arg0: i32) -> (i32, i32, i32) {
    %c0_i32 = arith.constant 0 : i32
    %c0_i32_0 = arith.constant 0 : i32
    %c0_i32_1 = arith.constant 0 : i32
    return %arg0, %c0_i32, %c0_i32_0 : i32, i32, i32
  }
}

</mosaic_0001>

<llo_original>
// kernel: tpu_custom_call.1
$region0: #{tpu_custom_call.1}
  #allocation0 [shape = 'u32[]', space=smem, size = 0x4, offset = 0x4, fixed_abs, tag = 'smem constant byte address 0x4 - core index']
  #allocation1 [shape = 'u32[144,128]{1,0:T(1,128)}', space=vmem, size = 0x12000, scoped, tag = 'internal scratch']
  %s0 = inlined_call_operand.vmem [shape: f32[16,128], index: 0, kind: input, shape index: {}]
  %s1 = inlined_call_operand.vmem [shape: s32[16,1], index: 1, kind: input, shape index: {}]
  %s2 = inlined_call_operand.hbm [shape: f32[2,8,128], index: 2, kind: output, shape index: {}]
  %s3 = sld [smem:[#allocation0]]
  $region41: #{tpu_custom_call.1} parent=0
    _
  %s5 = ssub.s32 1, %s3
  %s6 = scalar_select 0, %s5, %s3
  $region1: #{tpu_custom_call.1} parent=0
    #allocation2 [shape = 'u8[8192]{0}', space=vmem, size = 0x2000, scoped, tag = 'output window, operand 0']
    #allocation3 [shape = 's32[2]{0}', space=sflag, size = 0x8, scoped, tag = 'scoped memory for tpu_custom_call.1']
    %7 = vsyncpa [#allocation3], 0
    %s8 = scalar_lea.sflag [#allocation3], 1
    %9 = vsyncpa %s8, 0
    loop: start=0, step=1, limit=4
    $region2: #{tpu_custom_call.1} parent=1 // loop_pre_header
      _
    $region3: #{tpu_custom_call.1} parent=1 // loop_header
      %s11 = sphi 0, %s15
      %p12 = scmp.ge.s32.totalorder %s11, 4
      %s21 = sphi 0, %s23
      %s24 = sphi 0, %s21
      %s25 = sphi 0, %s24
      %s41 = sphi 0, %s25
      %s47 = sphi 0, %s49
      %s50 = sphi 0, %s47
      %s51 = sphi 0, %s50
      %s67 = sphi 0, %s51
      %s73 = sphi 0, %s75
      %s76 = sphi 0, %s73
      %s77 = sphi 0, %s76
      %s93 = sphi 0, %s77
    $region4: #{tpu_custom_call.1} parent=1 // loop_header_branch
      %14 = sbr.rel (%p12) target = $region8
    $region5: #{tpu_custom_call.1} parent=1 // loop_body
      %s16 = ssub.s32 %s11, 1
      %s17 = ssub.s32 %s11, 2
      %s18 = sadd.s32 %s11, 1
      %s19 = ssub.s32 %s11, %s18
      %p20 = scmp.eq.s32.totalorder %s19, 0
      %s22 = sadd.s32 %s21, 1
      %s23 = scalar_select %p20, %s21, %s22
      %p26 = pneg %p20
      %p27 = scmp.eq.s32.totalorder %s11, 1
      %p28 = por %p26, %p27
      %p29 = scmp.ne.s32.totalorder %s21, %s24
      %p30 = scmp.eq.s32.totalorder %s11, 0
      %p31 = por %p29, %p30
      %p32 = scmp.ne.s32.totalorder %s21, %s24
      %p33 = scmp.eq.s32.totalorder %s16, 1
      %p34 = por %p32, %p33
      %p35 = scmp.ne.s32.totalorder %s24, %s25
      %p36 = scmp.eq.s32.totalorder %s16, 0
      %p37 = por %p35, %p36
      %p38 = scmp.ne.s32.totalorder %s24, %s25
      %p39 = scmp.eq.s32.totalorder %s17, 1
      %p40 = por %p38, %p39
      %p42 = scmp.ne.s32.totalorder %s25, %s41
      %p43 = scmp.eq.s32.totalorder %s17, 0
      %p44 = por %p42, %p43
      %s45 = ssub.s32 %s11, %s18
      %p46 = scmp.eq.s32.totalorder %s45, 0
      %s48 = sadd.s32 %s47, 1
      %s49 = scalar_select %p46, %s47, %s48
      %p52 = pneg %p46
      %p53 = scmp.eq.s32.totalorder %s11, 1
      %p54 = por %p52, %p53
      %p55 = scmp.ne.s32.totalorder %s47, %s50
      %p56 = scmp.eq.s32.totalorder %s11, 0
      %p57 = por %p55, %p56
      %p58 = scmp.ne.s32.totalorder %s47, %s50
      %p59 = scmp.eq.s32.totalorder %s16, 1
      %p60 = por %p58, %p59
      %p61 = scmp.ne.s32.totalorder %s50, %s51
      %p62 = scmp.eq.s32.totalorder %s16, 0
      %p63 = por %p61, %p62
      %p64 = scmp.ne.s32.totalorder %s50, %s51
      %p65 = scmp.eq.s32.totalorder %s17, 1
      %p66 = por %p64, %p65
      %p68 = scmp.ne.s32.totalorder %s51, %s67
      %p69 = scmp.eq.s32.totalorder %s17, 0
      %p70 = por %p68, %p69
      %s71 = ssub.s32 %s11, %s18
      %p72 = scmp.eq.s32.totalorder %s71, 0
      %s74 = sadd.s32 %s73, 1
      %s75 = scalar_select %p72, %s73, %s74
      %p78 = pneg %p72
      %p79 = scmp.eq.s32.totalorder %s11, 1
      %p80 = por %p78, %p79
      %p81 = scmp.ne.s32.totalorder %s73, %s76
      %p82 = scmp.eq.s32.totalorder %s11, 0
      %p83 = por %p81, %p82
      %p84 = scmp.ne.s32.totalorder %s73, %s76
      %p85 = scmp.eq.s32.totalorder %s16, 1
      %p86 = por %p84, %p85
      %p87 = scmp.ne.s32.totalorder %s76, %s77
      %p88 = scmp.eq.s32.totalorder %s16, 0
      %p89 = por %p87, %p88
      %p90 = scmp.ne.s32.totalorder %s76, %s77
      %p91 = scmp.eq.s32.totalorder %s17, 1
      %p92 = por %p90, %p91
      %p94 = scmp.ne.s32.totalorder %s77, %s93
      %p95 = scmp.eq.s32.totalorder %s17, 0
      %p96 = por %p94, %p95
      %p97 = scmp.le.s32.totalorder 1, %s11
      %p98 = scmp.lt.s32.totalorder %s11, 3
      %p99 = pnand %p97, %p98
      %p100 = pneg %p99
      // Predicated region
      $region9: #{tpu_custom_call.1} parent=5 // pred_check
        _
      $region10: #{tpu_custom_call.1} parent=5 // pred_check_branch
        %102 = sbr.rel (%p99) target = $region12
      $region11: #{tpu_custom_call.1} parent=5 // pred_region
        %s103 = ssub.s32 %s11, 1
      $region12: #{tpu_custom_call.1} parent=5 // pred_fallthru
        _
      %p104 = scmp.lt.s32.totalorder %s11, 2
      // Predicated region
      $region13: #{tpu_custom_call.1} parent=5 // pred_check
        %p105 = pneg %p104
      $region14: #{tpu_custom_call.1} parent=5 // pred_check_branch
        %107 = sbr.rel (%p105) target = $region16
      $region15: #{tpu_custom_call.1} parent=5 // pred_region
        // Predicated region
        $region17: #{tpu_custom_call.1} parent=15 // pred_check
          %p108 = pneg %p31
        $region18: #{tpu_custom_call.1} parent=15 // pred_check_branch
          %110 = sbr.rel (%p108) target = $region20
        $region19: #{tpu_custom_call.1} parent=15 // pred_region
          %p111 = scmp.lt.s32.totalorder %s11, 1
          %s112 = scalar_select %p111, %s11, 1
          %s113 = smul.addr %s112, 8
          %s114 = scalar_lea.vmem %s0, %s113
        $region20: #{tpu_custom_call.1} parent=15 // pred_fallthru
          _
        // Predicated region
        $region21: #{tpu_custom_call.1} parent=15 // pred_check
          %p115 = pneg %p57
        $region22: #{tpu_custom_call.1} parent=15 // pred_check_branch
          %117 = sbr.rel (%p115) target = $region24
        $region23: #{tpu_custom_call.1} parent=15 // pred_region
          %p118 = scmp.lt.s32.totalorder %s11, 1
          %s119 = scalar_select %p118, %s11, 1
          %s120 = smul.addr %s119, 8
          %s121 = scalar_lea.vmem %s1, %s120
        $region24: #{tpu_custom_call.1} parent=15 // pred_fallthru
          _
      $region16: #{tpu_custom_call.1} parent=5 // pred_fallthru
        _
      %p122 = scmp.le.s32.totalorder 1, %s11
      %p123 = scmp.lt.s32.totalorder %s11, 3
      %p124 = pnand %p122, %p123
      %p125 = pneg %p124
      // Predicated region
      $region25: #{tpu_custom_call.1} parent=5 // pred_check
        _
      $region26: #{tpu_custom_call.1} parent=5 // pred_check_branch
        %127 = sbr.rel (%p124) target = $region28
      $region27: #{tpu_custom_call.1} parent=5 // pred_region
        %s128 = ssub.s32 %s11, 1
        %p129 = scmp.lt.s32.totalorder %s16, 1
        %s130 = scalar_select %p129, %s16, 1
        %s131 = smul.addr %s130, 8
        %s132 = scalar_lea.vmem %s0, %s131
        %p133 = pneg %p37
        %p134 = pneg %p34
        %p135 = scmp.lt.s32.totalorder %s16, 1
        %s136 = scalar_select %p135, %s16, 1
        %s137 = smul.addr %s136, 8
        %s138 = scalar_lea.vmem %s1, %s137
        %p139 = pneg %p63
        %p140 = pneg %p60
        %p141 = pneg %p89
        %p142 = pneg %p86
        %s143 = sand.u32 %s76, 1
        %s144 = scalar_lea.sflag [#allocation3], %s143
        %s145 = sand.u32 %s76, 1
        %s146 = smul.addr %s145, 8
        %s147 = scalar_lea.vmem [#allocation2], %s146
        %p148 = scmp.lt.s32.totalorder %s16, 1
        %s149 = scalar_select %p148, %s16, 1
        %s150 = smul.addr %s149, 8
        %s151 = scalar_lea.vmem %s0, %s150
        %p152 = scmp.lt.s32.totalorder %s16, 1
        %s153 = scalar_select %p152, %s16, 1
        %s154 = smul.addr %s153, 8
        %s155 = scalar_lea.vmem %s1, %s154
        %v156 = vld [vmem:[%s151] sm:$0xff]
        %v157 = vld [vmem:[%s155] sm:$0xff]
        %158 = vmax.xlane.f32.xlu0 %v156
        %v159 = vpop.xlane.xlu0 %158
        %v160 = vsub.f32 %v156, %v159
        %v161 = vmul.f32 %v160, 1.442695
        %v162 = vpow.pop %v161
        %163 = vmatprep.subr.mxu0 0.0
        %164 = vmatpush1.msra.mxu0 1.0
        %165 = vmatprep.subr.mxu0 0.0
        %166 = vmatpush1.msra.mxu0 1.0
        %167 = vmatprep.subr.mxu0 0.0
        %168 = vmatpush1.msra.mxu0 1.0
        %169 = vmatprep.subr.mxu0 0.0
        %170 = vmatpush1.msra.mxu0 1.0
        %171 = vmatprep.subr.mxu0 0.0
        %172 = vmatpush1.msra.mxu0 1.0
        %173 = vmatprep.subr.mxu0 0.0
        %174 = vmatpush1.msra.mxu0 1.0
        %175 = vmatprep.subr.mxu0 0.0
        %176 = vmatpush1.msra.mxu0 1.0
        %177 = vmatprep.subr.mxu0 0.0
        %178 = vmatpush1.msra.mxu0 1.0
        %179 = vmatprep.subr.mxu0 0.0
        %180 = vmatpush1.msra.mxu0 1.0
        %181 = vmatprep.subr.mxu0 0.0
        %182 = vmatpush1.msra.mxu0 1.0
        %183 = vmatprep.subr.mxu0 0.0
        %184 = vmatpush1.msra.mxu0 1.0
        %185 = vmatprep.subr.mxu0 0.0
        %186 = vmatpush1.msra.mxu0 1.0
        %187 = vmatprep.subr.mxu0 0.0
        %188 = vmatpush1.msra.mxu0 1.0
        %189 = vmatprep.subr.mxu0 0.0
        %190 = vmatpush1.msra.mxu0 1.0
        %191 = vmatprep.subr.mxu0 0.0
        %192 = vmatpush1.msra.mxu0 1.0
        %193 = vmatprep.subr.mxu0 0.0
        %194 = vmatpush1.msra.mxu0 1.0
        %195 = vmatprep.subr.mxu0 0.0
        %196 = vmatpush1.msra.mxu0 0.0
        %197 = vmatprep.subr.mxu0 0.0
        %198 = vmatpush1.msra.mxu0 0.0
        %199 = vmatprep.subr.mxu0 0.0
        %200 = vmatpush1.msra.mxu0 0.0
        %201 = vmatprep.subr.mxu0 0.0
        %202 = vmatpush1.msra.mxu0 0.0
        %203 = vmatprep.subr.mxu0 0.0
        %204 = vmatpush1.msra.mxu0 0.0
        %205 = vmatprep.subr.mxu0 0.0
        %206 = vmatpush1.msra.mxu0 0.0
        %207 = vmatprep.subr.mxu0 0.0
        %208 = vmatpush1.msra.mxu0 0.0
        %209 = vmatprep.subr.mxu0 0.0
        %210 = vmatpush1.msra.mxu0 0.0
        %211 = vmatprep.subr.mxu0 0.0
        %212 = vmatpush1.msra.mxu0 0.0
        %213 = vmatprep.subr.mxu0 0.0
        %214 = vmatpush1.msra.mxu0 0.0
        %215 = vmatprep.subr.mxu0 0.0
        %216 = vmatpush1.msra.mxu0 0.0
        %217 = vmatprep.subr.mxu0 0.0
        %218 = vmatpush1.msra.mxu0 0.0
        %219 = vmatprep.subr.mxu0 0.0
        %220 = vmatpush1.msra.mxu0 0.0
        %221 = vmatprep.subr.mxu0 0.0
        %222 = vmatpush1.msra.mxu0 0.0
        %223 = vmatprep.subr.mxu0 0.0
        %224 = vmatpush1.msra.mxu0 0.0
        %225 = vmatprep.subr.mxu0 0.0
        %226 = vmatpush1.msra.mxu0 0.0
        %227 = vmatprep.mubr.f32.mxu0 0.0
        %v228 = vand.u32 %v162, 4294901760
        %v229 = vsub.f32 %v162, %v228
        %v230 = vand.u32 %v229, 4294901760
        %v231 = vsub.f32 %v229, %v230
        %v232 = vand.u32 %v231, 4294901760
        %233 = vmatmul.mubr.f32.gmra.mrb[0].mxu0 %v232
        %v234 = vpop.f32.mrb[0].mxu0
        %v235 = vadd.f32 0.0, %v234
        %v236 = vpop.f32.mrb[0].mxu0
        %237 = vdwg.mxu0
        %238 = vmatprep.subr.mxu0 0.0
        %239 = vmatpush1.msra.mxu0 0.0
        %240 = vmatprep.subr.mxu0 0.0
        %241 = vmatpush1.msra.mxu0 0.0
        %242 = vmatprep.subr.mxu0 0.0
        %243 = vmatpush1.msra.mxu0 0.0
        %244 = vmatprep.subr.mxu0 0.0
        %245 = vmatpush1.msra.mxu0 0.0
        %246 = vmatprep.subr.mxu0 0.0
        %247 = vmatpush1.msra.mxu0 0.0
        %248 = vmatprep.subr.mxu0 0.0
        %249 = vmatpush1.msra.mxu0 0.0
        %250 = vmatprep.subr.mxu0 0.0
        %251 = vmatpush1.msra.mxu0 0.0
        %252 = vmatprep.subr.mxu0 0.0
        %253 = vmatpush1.msra.mxu0 0.0
        %254 = vmatprep.subr.mxu0 0.0
        %255 = vmatpush1.msra.mxu0 0.0
        %256 = vmatprep.subr.mxu0 0.0
        %257 = vmatpush1.msra.mxu0 0.0
        %258 = vmatprep.subr.mxu0 0.0
        %259 = vmatpush1.msra.mxu0 0.0
        %260 = vmatprep.subr.mxu0 0.0
        %261 = vmatpush1.msra.mxu0 0.0
        %262 = vmatprep.subr.mxu0 0.0
        %263 = vmatpush1.msra.mxu0 0.0
        %264 = vmatprep.subr.mxu0 0.0
        %265 = vmatpush1.msra.mxu0 0.0
        %266 = vmatprep.subr.mxu0 0.0
        %267 = vmatpush1.msra.mxu0 0.0
        %268 = vmatprep.subr.mxu0 0.0
        %269 = vmatpush1.msra.mxu0 0.0
        %270 = vmatprep.subr.mxu0 0.0
        %271 = vmatpush1.msra.mxu0 0.0
        %272 = vmatprep.subr.mxu0 0.0
        %273 = vmatpush1.msra.mxu0 0.0
        %274 = vmatprep.subr.mxu0 0.0
        %275 = vmatpush1.msra.mxu0 0.0
        %276 = vmatprep.subr.mxu0 0.0
        %277 = vmatpush1.msra.mxu0 0.0
        %278 = vmatprep.subr.mxu0 0.0
        %279 = vmatpush1.msra.mxu0 0.0
        %280 = vmatprep.subr.mxu0 0.0
        %281 = vmatpush1.msra.mxu0 0.0
        %282 = vmatprep.subr.mxu0 0.0
        %283 = vmatpush1.msra.mxu0 0.0
        %284 = vmatprep.subr.mxu0 0.0
        %285 = vmatpush1.msra.mxu0 0.0
        %286 = vmatprep.subr.mxu0 0.0
        %287 = vmatpush1.msra.mxu0 0.0
        %288 = vmatprep.subr.mxu0 0.0
        %289 = vmatpush1.msra.mxu0 0.0
        %290 = vmatprep.subr.mxu0 0.0
        %291 = vmatpush1.msra.mxu0 0.0
        %292 = vmatprep.subr.mxu0 0.0
        %293 = vmatpush1.msra.mxu0 0.0
        %294 = vmatprep.subr.mxu0 0.0
        %295 = vmatpush1.msra.mxu0 0.0
        %296 = vmatprep.subr.mxu0 0.0
        %297 = vmatpush1.msra.mxu0 0.0
        %298 = vmatprep.subr.mxu0 0.0
        %299 = vmatpush1.msra.mxu0 0.0
        %300 = vmatprep.subr.mxu0 0.0
        %301 = vmatpush1.msra.mxu0 0.0
        %302 = vmatprep.mubr.f32.mxu0 0.0
        %v303 = vand.u32 %v162, 4294901760
        %304 = vmatmul.mubr.f32.gmra.mrb[0].mxu0 %v303
        %v305 = vpop.f32.mrb[0].mxu0
        %v306 = vadd.f32 %v235, %v305
        %v307 = vpop.f32.mrb[0].mxu0
        %308 = vdwg.mxu0
        %309 = vmatprep.subr.mxu0 0.0
        %310 = vmatpush1.msra.mxu0 0.0
        %311 = vmatprep.subr.mxu0 0.0
        %312 = vmatpush1.msra.mxu0 0.0
        %313 = vmatprep.subr.mxu0 0.0
        %314 = vmatpush1.msra.mxu0 0.0
        %315 = vmatprep.subr.mxu0 0.0
        %316 = vmatpush1.msra.mxu0 0.0
        %317 = vmatprep.subr.mxu0 0.0
        %318 = vmatpush1.msra.mxu0 0.0
        %319 = vmatprep.subr.mxu0 0.0
        %320 = vmatpush1.msra.mxu0 0.0
        %321 = vmatprep.subr.mxu0 0.0
        %322 = vmatpush1.msra.mxu0 0.0
        %323 = vmatprep.subr.mxu0 0.0
        %324 = vmatpush1.msra.mxu0 0.0
        %325 = vmatprep.subr.mxu0 0.0
        %326 = vmatpush1.msra.mxu0 0.0
        %327 = vmatprep.subr.mxu0 0.0
        %328 = vmatpush1.msra.mxu0 0.0
        %329 = vmatprep.subr.mxu0 0.0
        %330 = vmatpush1.msra.mxu0 0.0
        %331 = vmatprep.subr.mxu0 0.0
        %332 = vmatpush1.msra.mxu0 0.0
        %333 = vmatprep.subr.mxu0 0.0
        %334 = vmatpush1.msra.mxu0 0.0
        %335 = vmatprep.subr.mxu0 0.0
        %336 = vmatpush1.msra.mxu0 0.0
        %337 = vmatprep.subr.mxu0 0.0
        %338 = vmatpush1.msra.mxu0 0.0
        %339 = vmatprep.subr.mxu0 0.0
        %340 = vmatpush1.msra.mxu0 0.0
        %341 = vmatprep.subr.mxu0 0.0
        %342 = vmatpush1.msra.mxu0 0.0
        %343 = vmatprep.subr.mxu0 0.0
        %344 = vmatpush1.msra.mxu0 0.0
        %345 = vmatprep.subr.mxu0 0.0
        %346 = vmatpush1.msra.mxu0 0.0
        %347 = vmatprep.subr.mxu0 0.0
        %348 = vmatpush1.msra.mxu0 0.0
        %349 = vmatprep.subr.mxu0 0.0
        %350 = vmatpush1.msra.mxu0 0.0
        %351 = vmatprep.subr.mxu0 0.0
        %352 = vmatpush1.msra.mxu0 0.0
        %353 = vmatprep.subr.mxu0 0.0
        %354 = vmatpush1.msra.mxu0 0.0
        %355 = vmatprep.subr.mxu0 0.0
        %356 = vmatpush1.msra.mxu0 0.0
        %357 = vmatprep.subr.mxu0 0.0
        %358 = vmatpush1.msra.mxu0 0.0
        %359 = vmatprep.subr.mxu0 0.0
        %360 = vmatpush1.msra.mxu0 0.0
        %361 = vmatprep.subr.mxu0 0.0
        %362 = vmatpush1.msra.mxu0 0.0
        %363 = vmatprep.subr.mxu0 0.0
        %364 = vmatpush1.msra.mxu0 0.0
        %365 = vmatprep.subr.mxu0 0.0
        %366 = vmatpush1.msra.mxu0 0.0
        %367 = vmatprep.subr.mxu0 0.0
        %368 = vmatpush1.msra.mxu0 0.0
        %369 = vmatprep.subr.mxu0 0.0
        %370 = vmatpush1.msra.mxu0 0.0
        %371 = vmatprep.subr.mxu0 0.0
        %372 = vmatpush1.msra.mxu0 0.0
        %373 = vmatprep.mubr.f32.mxu0 0.0
        %v374 = vand.u32 %v162, 4294901760
        %v375 = vsub.f32 %v162, %v374
        %376 = vmatmul.mubr.f32.gmra.mrb[0].mxu0 %v375
        %v377 = vpop.f32.mrb[0].mxu0
        %v378 = vadd.f32 %v306, %v377
        %v379 = vpop.f32.mrb[0].mxu0
        %380 = vdwg.mxu0
        %381 = vmatprep.subr.mxu0 0.0
        %382 = vmatpush1.msra.mxu0 1.0
        %383 = vmatprep.subr.mxu0 0.0
        %384 = vmatpush1.msra.mxu0 1.0
        %385 = vmatprep.subr.mxu0 0.0
        %386 = vmatpush1.msra.mxu0 1.0
        %387 = vmatprep.subr.mxu0 0.0
        %388 = vmatpush1.msra.mxu0 1.0
        %389 = vmatprep.subr.mxu0 0.0
        %390 = vmatpush1.msra.mxu0 1.0
        %391 = vmatprep.subr.mxu0 0.0
        %392 = vmatpush1.msra.mxu0 1.0
        %393 = vmatprep.subr.mxu0 0.0
        %394 = vmatpush1.msra.mxu0 1.0
        %395 = vmatprep.subr.mxu0 0.0
        %396 = vmatpush1.msra.mxu0 1.0
        %397 = vmatprep.subr.mxu0 0.0
        %398 = vmatpush1.msra.mxu0 1.0
        %399 = vmatprep.subr.mxu0 0.0
        %400 = vmatpush1.msra.mxu0 1.0
        %401 = vmatprep.subr.mxu0 0.0
        %402 = vmatpush1.msra.mxu0 1.0
        %403 = vmatprep.subr.mxu0 0.0
        %404 = vmatpush1.msra.mxu0 1.0
        %405 = vmatprep.subr.mxu0 0.0
        %406 = vmatpush1.msra.mxu0 1.0
        %407 = vmatprep.subr.mxu0 0.0
        %408 = vmatpush1.msra.mxu0 1.0
        %409 = vmatprep.subr.mxu0 0.0
        %410 = vmatpush1.msra.mxu0 1.0
        %411 = vmatprep.subr.mxu0 0.0
        %412 = vmatpush1.msra.mxu0 1.0
        %413 = vmatprep.subr.mxu0 0.0
        %414 = vmatpush1.msra.mxu0 0.0
        %415 = vmatprep.subr.mxu0 0.0
        %416 = vmatpush1.msra.mxu0 0.0
        %417 = vmatprep.subr.mxu0 0.0
        %418 = vmatpush1.msra.mxu0 0.0
        %419 = vmatprep.subr.mxu0 0.0
        %420 = vmatpush1.msra.mxu0 0.0
        %421 = vmatprep.subr.mxu0 0.0
        %422 = vmatpush1.msra.mxu0 0.0
        %423 = vmatprep.subr.mxu0 0.0
        %424 = vmatpush1.msra.mxu0 0.0
        %425 = vmatprep.subr.mxu0 0.0
        %426 = vmatpush1.msra.mxu0 0.0
        %427 = vmatprep.subr.mxu0 0.0
        %428 = vmatpush1.msra.mxu0 0.0
        %429 = vmatprep.subr.mxu0 0.0
        %430 = vmatpush1.msra.mxu0 0.0
        %431 = vmatprep.subr.mxu0 0.0
        %432 = vmatpush1.msra.mxu0 0.0
        %433 = vmatprep.subr.mxu0 0.0
        %434 = vmatpush1.msra.mxu0 0.0
        %435 = vmatprep.subr.mxu0 0.0
        %436 = vmatpush1.msra.mxu0 0.0
        %437 = vmatprep.subr.mxu0 0.0
        %438 = vmatpush1.msra.mxu0 0.0
        %439 = vmatprep.subr.mxu0 0.0
        %440 = vmatpush1.msra.mxu0 0.0
        %441 = vmatprep.subr.mxu0 0.0
        %442 = vmatpush1.msra.mxu0 0.0
        %443 = vmatprep.subr.mxu0 0.0
        %444 = vmatpush1.msra.mxu0 0.0
        %445 = vmatprep.mubr.f32.mxu0 0.0
        %v446 = vand.u32 %v162, 4294901760
        %v447 = vsub.f32 %v162, %v446
        %v448 = vand.u32 %v447, 4294901760
        %449 = vmatmul.mubr.f32.gmra.mrb[0].mxu0 %v448
        %v450 = vpop.f32.mrb[0].mxu0
        %v451 = vadd.f32 %v378, %v450
        %v452 = vpop.f32.mrb[0].mxu0
        %453 = vdwg.mxu0
        %454 = vmatprep.subr.mxu0 0.0
        %455 = vmatpush1.msra.mxu0 0.0
        %456 = vmatprep.subr.mxu0 0.0
        %457 = vmatpush1.msra.mxu0 0.0
        %458 = vmatprep.subr.mxu0 0.0
        %459 = vmatpush1.msra.mxu0 0.0
        %460 = vmatprep.subr.mxu0 0.0
        %461 = vmatpush1.msra.mxu0 0.0
        %462 = vmatprep.subr.mxu0 0.0
        %463 = vmatpush1.msra.mxu0 0.0
        %464 = vmatprep.subr.mxu0 0.0
        %465 = vmatpush1.msra.mxu0 0.0
        %466 = vmatprep.subr.mxu0 0.0
        %467 = vmatpush1.msra.mxu0 0.0
        %468 = vmatprep.subr.mxu0 0.0
        %469 = vmatpush1.msra.mxu0 0.0
        %470 = vmatprep.subr.mxu0 0.0
        %471 = vmatpush1.msra.mxu0 0.0
        %472 = vmatprep.subr.mxu0 0.0
        %473 = vmatpush1.msra.mxu0 0.0
        %474 = vmatprep.subr.mxu0 0.0
        %475 = vmatpush1.msra.mxu0 0.0
        %476 = vmatprep.subr.mxu0 0.0
        %477 = vmatpush1.msra.mxu0 0.0
        %478 = vmatprep.subr.mxu0 0.0
        %479 = vmatpush1.msra.mxu0 0.0
        %480 = vmatprep.subr.mxu0 0.0
        %481 = vmatpush1.msra.mxu0 0.0
        %482 = vmatprep.subr.mxu0 0.0
        %483 = vmatpush1.msra.mxu0 0.0
        %484 = vmatprep.subr.mxu0 0.0
        %485 = vmatpush1.msra.mxu0 0.0
        %486 = vmatprep.subr.mxu0 0.0
        %487 = vmatpush1.msra.mxu0 0.0
        %488 = vmatprep.subr.mxu0 0.0
        %489 = vmatpush1.msra.mxu0 0.0
        %490 = vmatprep.subr.mxu0 0.0
        %491 = vmatpush1.msra.mxu0 0.0
        %492 = vmatprep.subr.mxu0 0.0
        %493 = vmatpush1.msra.mxu0 0.0
        %494 = vmatprep.subr.mxu0 0.0
        %495 = vmatpush1.msra.mxu0 0.0
        %496 = vmatprep.subr.mxu0 0.0
        %497 = vmatpush1.msra.mxu0 0.0
        %498 = vmatprep.subr.mxu0 0.0
        %499 = vmatpush1.msra.mxu0 0.0
        %500 = vmatprep.subr.mxu0 0.0
        %501 = vmatpush1.msra.mxu0 0.0
        %502 = vmatprep.subr.mxu0 0.0
        %503 = vmatpush1.msra.mxu0 0.0
        %504 = vmatprep.subr.mxu0 0.0
        %505 = vmatpush1.msra.mxu0 0.0
        %506 = vmatprep.subr.mxu0 0.0
        %507 = vmatpush1.msra.mxu0 0.0
        %508 = vmatprep.subr.mxu0 0.0
        %509 = vmatpush1.msra.mxu0 0.0
        %510 = vmatprep.subr.mxu0 0.0
        %511 = vmatpush1.msra.mxu0 0.0
        %512 = vmatprep.subr.mxu0 0.0
        %513 = vmatpush1.msra.mxu0 0.0
        %514 = vmatprep.subr.mxu0 0.0
        %515 = vmatpush1.msra.mxu0 0.0
        %516 = vmatprep.subr.mxu0 0.0
        %517 = vmatpush1.msra.mxu0 0.0
        %518 = vmatprep.mubr.f32.mxu0 0.0
        %v519 = vand.u32 %v162, 4294901760
        %520 = vmatmul.mubr.f32.gmra.mrb[0].mxu0 %v519
        %v521 = vpop.f32.mrb[0].mxu0
        %v522 = vadd.f32 %v451, %v521
        %v523 = vpop.f32.mrb[0].mxu0
        %524 = vdwg.mxu0
        %525 = vmatprep.subr.mxu0 0.0
        %526 = vmatpush1.msra.mxu0 1.0
        %527 = vmatprep.subr.mxu0 0.0
        %528 = vmatpush1.msra.mxu0 1.0
        %529 = vmatprep.subr.mxu0 0.0
        %530 = vmatpush1.msra.mxu0 1.0
        %531 = vmatprep.subr.mxu0 0.0
        %532 = vmatpush1.msra.mxu0 1.0
        %533 = vmatprep.subr.mxu0 0.0
        %534 = vmatpush1.msra.mxu0 1.0
        %535 = vmatprep.subr.mxu0 0.0
        %536 = vmatpush1.msra.mxu0 1.0
        %537 = vmatprep.subr.mxu0 0.0
        %538 = vmatpush1.msra.mxu0 1.0
        %539 = vmatprep.subr.mxu0 0.0
        %540 = vmatpush1.msra.mxu0 1.0
        %541 = vmatprep.subr.mxu0 0.0
        %542 = vmatpush1.msra.mxu0 1.0
        %543 = vmatprep.subr.mxu0 0.0
        %544 = vmatpush1.msra.mxu0 1.0
        %545 = vmatprep.subr.mxu0 0.0
        %546 = vmatpush1.msra.mxu0 1.0
        %547 = vmatprep.subr.mxu0 0.0
        %548 = vmatpush1.msra.mxu0 1.0
        %549 = vmatprep.subr.mxu0 0.0
        %550 = vmatpush1.msra.mxu0 1.0
        %551 = vmatprep.subr.mxu0 0.0
        %552 = vmatpush1.msra.mxu0 1.0
        %553 = vmatprep.subr.mxu0 0.0
        %554 = vmatpush1.msra.mxu0 1.0
        %555 = vmatprep.subr.mxu0 0.0
        %556 = vmatpush1.msra.mxu0 1.0
        %557 = vmatprep.subr.mxu0 0.0
        %558 = vmatpush1.msra.mxu0 0.0
        %559 = vmatprep.subr.mxu0 0.0
        %560 = vmatpush1.msra.mxu0 0.0
        %561 = vmatprep.subr.mxu0 0.0
        %562 = vmatpush1.msra.mxu0 0.0
        %563 = vmatprep.subr.mxu0 0.0
        %564 = vmatpush1.msra.mxu0 0.0
        %565 = vmatprep.subr.mxu0 0.0
        %566 = vmatpush1.msra.mxu0 0.0
        %567 = vmatprep.subr.mxu0 0.0
        %568 = vmatpush1.msra.mxu0 0.0
        %569 = vmatprep.subr.mxu0 0.0
        %570 = vmatpush1.msra.mxu0 0.0
        %571 = vmatprep.subr.mxu0 0.0
        %572 = vmatpush1.msra.mxu0 0.0
        %573 = vmatprep.subr.mxu0 0.0
        %574 = vmatpush1.msra.mxu0 0.0
        %575 = vmatprep.subr.mxu0 0.0
        %576 = vmatpush1.msra.mxu0 0.0
        %577 = vmatprep.subr.mxu0 0.0
        %578 = vmatpush1.msra.mxu0 0.0
        %579 = vmatprep.subr.mxu0 0.0
        %580 = vmatpush1.msra.mxu0 0.0
        %581 = vmatprep.subr.mxu0 0.0
        %582 = vmatpush1.msra.mxu0 0.0
        %583 = vmatprep.subr.mxu0 0.0
        %584 = vmatpush1.msra.mxu0 0.0
        %585 = vmatprep.subr.mxu0 0.0
        %586 = vmatpush1.msra.mxu0 0.0
        %587 = vmatprep.subr.mxu0 0.0
        %588 = vmatpush1.msra.mxu0 0.0
        %589 = vmatprep.mubr.f32.mxu0 0.0
        %v590 = vand.u32 %v162, 4294901760
        %591 = vmatmul.mubr.f32.gmra.mrb[0].mxu0 %v590
        %v592 = vpop.f32.mrb[0].mxu0
        %v593 = vadd.f32 %v522, %v592
        %v594 = vpop.f32.mrb[0].mxu0
        %595 = vdwg.mxu0
        %v596 = vlog2.pop %v593
        %v597 = vmul.f32 %v596, 0.6931472
        %v598 = vadd.f32 %v597, %v159
        %v599 = vlaneseq
        %v600 = vand.u32 %v599, 127
        %601 = vset.pattern.permute.xlu0 0
        %602 = vperm.xlu0 %601, %v157
        %v603 = vpop.permute.xlu0 %602
        %vm604 = vcmp.eq.s32.totalorder %v600, %v603
        %v605 = vsel %vm604, %v156, 0.0
        %v606 = vrot.slane %v156, 4
        %v607 = vadd.f32 %v156, %v606
        %v608 = vrot.slane %v607, 2
        %v609 = vadd.f32 %v607, %v608
        %v610 = vrot.slane %v609, 1
        %v611 = vadd.f32 %v609, %v610
        %v612 = vrot.slane %v605, 4
        %v613 = vadd.f32 %v605, %v612
        %v614 = vrot.slane %v613, 2
        %v615 = vadd.f32 %v613, %v614
        %v616 = vrot.slane %v615, 1
        %v617 = vadd.f32 %v615, %v616
        %618 = vadd.xlane.f32.xlu0 %v611
        %v619 = vpop.xlane.xlu0 %618
        %620 = vadd.xlane.f32.xlu0 %v617
        %v621 = vpop.xlane.xlu0 %620
        %vm622 = vcmask 7168
        %v623 = vsel %vm622, %v598, 0.0
        %v624 = vrot.slane %v623, 4
        %v625 = vadd.f32 %v623, %v624
        %v626 = vrot.slane %v625, 2
        %v627 = vadd.f32 %v625, %v626
        %v628 = vrot.slane %v627, 1
        %v629 = vadd.f32 %v627, %v628
        %v630 = vmul.f32 %v629, 128.0
        %v631 = vsub.f32 %v630, %v619
        %v632 = vmul.f32 %v631, 0.0007874016
        %v633 = vsub.f32 %v629, %v621
        %v634 = vmul.f32 %v633, 0.8992126
        %v635 = vadd.f32 %v632, %v634
        %637 = vset.pattern.permute.xlu0 0
        %638 = vperm.xlu0 %637, %v635
        %v639 = vpop.permute.xlu0 %638
        %641 = vst [vmem:[%s147] sm:$0xff] %v639
        %s642 = sand.u32 %s76, 1
        %s643 = scalar_lea.sflag [#allocation3], %s642
        %s644 = sand.u32 %s76, 1
        %s645 = smul.addr %s644, 8
        %s646 = scalar_lea.vmem [#allocation2], %s645
        // Predicated region
        $region29: #{tpu_custom_call.1} parent=27 // pred_check
          %p647 = pneg %p86
        $region30: #{tpu_custom_call.1} parent=27 // pred_check_branch
          %649 = sbr.rel (%p647) target = $region32
        $region31: #{tpu_custom_call.1} parent=27 // pred_region
          %s651 = ssub.s32 128, 128
          %652 = vsyncadd %s643, %s651
          %s653 = smul.addr %s16, 128
          %s654 = scalar_lea.hbm %s2, %s653
          %s656 = sshll.u32 %s646, 4
          %s657 = int_to_ptr.vmem [resolvable:$true] %s656
          %659 = dma.vmem_to_hbm [thread:$0]  %s657, 128, %s654, %s643
        $region32: #{tpu_custom_call.1} parent=27 // pred_fallthru
          _
      $region28: #{tpu_custom_call.1} parent=5 // pred_fallthru
        _
      %p660 = scmp.le.s32.totalorder 2, %s11
      // Predicated region
      $region33: #{tpu_custom_call.1} parent=5 // pred_check
        %p661 = pneg %p660
      $region34: #{tpu_custom_call.1} parent=5 // pred_check_branch
        %663 = sbr.rel (%p661) target = $region36
      $region35: #{tpu_custom_call.1} parent=5 // pred_region
        %s664 = ssub.s32 %s11, 2
        // Predicated region
        $region37: #{tpu_custom_call.1} parent=35 // pred_check
          %p665 = pneg %p92
        $region38: #{tpu_custom_call.1} parent=35 // pred_check_branch
          %667 = sbr.rel (%p665) target = $region40
        $region39: #{tpu_custom_call.1} parent=35 // pred_region
          %s668 = sand.u32 %s77, 1
          %s669 = scalar_lea.sflag [#allocation3], %s668
          %s670 = sand.u32 %s77, 1
          %s671 = smul.addr %s670, 8
          %s672 = scalar_lea.vmem [#allocation2], %s671
          %673 = dma.done %s669, 128
        $region40: #{tpu_custom_call.1} parent=35 // pred_fallthru
          _
      $region36: #{tpu_custom_call.1} parent=5 // pred_fallthru
        _
    $region6: #{tpu_custom_call.1} parent=1 // loop_footer
      %s15 = sadd.s32 1, %s11
    $region7: #{tpu_custom_call.1} parent=1 // loop_footer_branch
      %10 = sbr.rel target = $region3
    $region8: #{tpu_custom_call.1} parent=1 // loop_exit
      _
    %674 = vsyncpa [#allocation3], 1
    %s675 = scalar_lea.sflag [#allocation3], 1
    %676 = vsyncpa %s675, 1

</llo_original>
